<compile_context>
chip_gen: v7x
topology: tpu7x:2x2x1
jax: 0.10.0
libtpu: 0.0.40
codegen_flags: <defaults>
</compile_context>

<pallas_src>
import jax
import jax.numpy as jnp
from jax.experimental import pallas as pl
from jax.experimental.pallas import tpu as pltpu


def _absorption_kernel(trans_ref, field_ref, out_ref):
    # clamp transmission into [0, 1] and apply to both complex planes
    t = jnp.clip(trans_ref[...], 0.0, 1.0)
    out_ref[0, :, :] = field_ref[0, :, :] * t
    out_ref[1, :, :] = field_ref[1, :, :] * t


def _choose_tiles(M: int, N: int) -> tuple[int, int]:
    """Pick a VMEM-budgeted (tm, tn) tile.

    tn: full width if N <= 2048 (lane-dense, == full dim so always legal),
        otherwise 2048 (multiple of 128).
    tm: sized so one (tm, tn) f32 plane is ~2 MiB; 5 planes x 2 buffers stays
        well under the 32 MiB scoped VMEM default on v5e/v6e/v7x.
    """
    tn = N if N <= 2048 else 2048
    budget_elems = 512 * 1024            # ~2 MiB per f32 plane
    tm = max(1, budget_elems // tn)
    if tm >= M:
        tm = M
    else:
        tm = max(8, (tm // 8) * 8)
    # keep at least 2 grid steps so v7x's 2 TensorCores both get work
    if pl.cdiv(M, tm) * pl.cdiv(N, tn) < 2 and M >= 16:
        half = (M + 1) // 2
        tm = max(8, ((half + 7) // 8) * 8)
        if tm >= M:
            tm = M
    return tm, tn


def absorption_mask_forward_planar(field_planar: jax.Array,
                                   transmission: jax.Array) -> jax.Array:
    """Fast path: field_planar float32 (2, M, N) = [real, imag] planes,
    transmission float32 (M, N).  Returns (2, M, N) float32 planes of
    field * clamp(transmission, 0, 1)."""
    assert field_planar.ndim == 3 and field_planar.shape[0] == 2
    _, M, N = field_planar.shape
    assert transmission.shape == (M, N)

    field_planar = field_planar.astype(jnp.float32)
    transmission = transmission.astype(jnp.float32)

    tm, tn = _choose_tiles(M, N)
    grid = (pl.cdiv(M, tm), pl.cdiv(N, tn))

    trans_spec = pl.BlockSpec((tm, tn), lambda i, j: (i, j))
    field_spec = pl.BlockSpec((2, tm, tn), lambda i, j: (0, i, j))

    out = pl.pallas_call(
        _absorption_kernel,
        out_shape=jax.ShapeDtypeStruct((2, M, N), jnp.float32),
        grid=grid,
        in_specs=[trans_spec, field_spec],
        out_specs=field_spec,
        compiler_params=pltpu.CompilerParams(
            dimension_semantics=("parallel", "parallel")),
    )(transmission, field_planar)
    return out


def absorption_mask_forward(field: jax.Array,
                            transmission: jax.Array) -> jax.Array:
    """Convenience complex64 wrapper (matches the PyTorch module signature).

    Note: the complex<->planar conversions here stream the field through HBM
    an extra time; callers that can keep the field planar should use
    absorption_mask_forward_planar directly."""
    assert field.ndim == 2, "module documents field as (M, N)"
    fp = jnp.stack([jnp.real(field), jnp.imag(field)]).astype(jnp.float32)
    out = absorption_mask_forward_planar(fp, transmission.astype(jnp.float32))
    res = jax.lax.complex(out[0], out[1])
    # PyTorch: if field.ndim == 2 -> return Eout_trans.squeeze()
    return jnp.squeeze(res)


if __name__ == "__main__":
    key = jax.random.PRNGKey(0)
    k1, k2, k3 = jax.random.split(key, 3)

    M, N = 256, 384  # small MxN optical field

    # transmission values span outside [0, 1] to exercise the clamp
    transmission = jax.random.uniform(k1, (M, N), jnp.float32,
                                      minval=-0.5, maxval=1.5)
    field_re = jax.random.normal(k2, (M, N), jnp.float32)
    field_im = jax.random.normal(k3, (M, N), jnp.float32)

    # --- fast planar path ---
    field_planar = jnp.stack([field_re, field_im])
    out_planar = absorption_mask_forward_planar(field_planar, transmission)
    out_planar = jax.block_until_ready(out_planar)

    t_clamped = jnp.clip(transmission, 0.0, 1.0)
    ref_re = field_re * t_clamped
    ref_im = field_im * t_clamped
    assert out_planar.shape == (2, M, N)
    assert jnp.allclose(out_planar[0], ref_re, atol=1e-6), "real-plane mismatch"
    assert jnp.allclose(out_planar[1], ref_im, atol=1e-6), "imag-plane mismatch"

    # --- complex convenience wrapper (same semantics as torch module) ---
    field_c = jax.lax.complex(field_re, field_im)
    out_c = absorption_mask_forward(field_c, transmission)
    out_c = jax.block_until_ready(out_c)
    ref_c = jnp.squeeze(field_c * t_clamped.astype(jnp.complex64))
    assert out_c.shape == ref_c.shape
    assert jnp.allclose(out_c, ref_c, atol=1e-6), "complex wrapper mismatch"

    print("KERNEL_OK")
</pallas_src>

<mosaic_0001>
module attributes {stable_mosaic.version = 11 : i64} {
  func.func @_absorption_kernel(%arg0: i32, %arg1: i32, %arg2: memref<128x384xf32, #tpu.memory_space<vmem>>, %arg3: memref<2x128x384xf32, #tpu.memory_space<vmem>>, %arg4: memref<2x128x384xf32, #tpu.memory_space<vmem>>) attributes {dimension_semantics = [#tpu.dimension_semantics<parallel>, #tpu.dimension_semantics<parallel>], iteration_bounds = array<i64: 2, 1>, scalar_prefetch = 0 : i64, scratch_operands = 0 : i64, tpu.core_type = #tpu.core_type<tc>, window_params = [{transform_indices = @transform_0, window_bounds = array<i64: 128, 384>}, {transform_indices = @transform_1, window_bounds = array<i64: 2, 128, 384>}, {transform_indices = @transform_2, window_bounds = array<i64: 2, 128, 384>}]} {
    %c0 = arith.constant 0 : index
    %c0_0 = arith.constant 0 : index
    %0 = vector.load %arg2[%c0, %c0_0] : memref<128x384xf32, #tpu.memory_space<vmem>>, vector<128x384xf32>
    %cst = arith.constant 0.000000e+00 : f32
    %cst_1 = arith.constant 1.000000e+00 : f32
    %1 = vector.broadcast %cst : f32 to vector<128x384xf32>
    %2 = arith.maximumf %1, %0 : vector<128x384xf32>
    %3 = vector.broadcast %cst_1 : f32 to vector<128x384xf32>
    %4 = arith.minimumf %3, %2 : vector<128x384xf32>
    %c0_2 = arith.constant 0 : index
    %c0_3 = arith.constant 0 : index
    %c0_4 = arith.constant 0 : index
    %5 = vector.load %arg3[%c0_2, %c0_3, %c0_4] : memref<2x128x384xf32, #tpu.memory_space<vmem>>, vector<1x128x384xf32>
    %6 = vector.shape_cast %5 : vector<1x128x384xf32> to vector<128x384xf32>
    %7 = arith.mulf %6, %4 : vector<128x384xf32>
    %c0_5 = arith.constant 0 : index
    %c0_6 = arith.constant 0 : index
    %c0_7 = arith.constant 0 : index
    %8 = vector.load %arg4[%c0_5, %c0_6, %c0_7] : memref<2x128x384xf32, #tpu.memory_space<vmem>>, vector<1x128x384xf32>
    %9 = vector.shape_cast %8 : vector<1x128x384xf32> to vector<128x384xf32>
    %10 = vector.shape_cast %7 : vector<128x384xf32> to vector<1x128x384xf32>
    tpu.vector_store %arg4[%c0_5, %c0_6, %c0_7], %10 {strides = array<i32>} : memref<2x128x384xf32, #tpu.memory_space<vmem>>, vector<1x128x384xf32>,
    %c1 = arith.constant 1 : index
    %c0_8 = arith.constant 0 : index
    %c0_9 = arith.constant 0 : index
    %11 = vector.load %arg3[%c1, %c0_8, %c0_9] : memref<2x128x384xf32, #tpu.memory_space<vmem>>, vector<1x128x384xf32>
    %12 = vector.shape_cast %11 : vector<1x128x384xf32> to vector<128x384xf32>
    %13 = arith.mulf %12, %4 : vector<128x384xf32>
    %c1_10 = arith.constant 1 : index
    %c0_11 = arith.constant 0 : index
    %c0_12 = arith.constant 0 : index
    %14 = vector.load %arg4[%c1_10, %c0_11, %c0_12] : memref<2x128x384xf32, #tpu.memory_space<vmem>>, vector<1x128x384xf32>
    %15 = vector.shape_cast %14 : vector<1x128x384xf32> to vector<128x384xf32>
    %16 = vector.shape_cast %13 : vector<128x384xf32> to vector<1x128x384xf32>
    tpu.vector_store %arg4[%c1_10, %c0_11, %c0_12], %16 {strides = array<i32>} : memref<2x128x384xf32, #tpu.memory_space<vmem>>, vector<1x128x384xf32>,
    return
  }
  func.func @transform_0(%arg0: i32, %arg1: i32) -> (i32, i32) {
    %c0_i32 = arith.constant 0 : i32
    return %arg0, %arg1 : i32, i32
  }
  func.func @transform_1(%arg0: i32, %arg1: i32) -> (i32, i32, i32) {
    %c0_i32 = arith.constant 0 : i32
    %c0_i32_0 = arith.constant 0 : i32
    return %c0_i32, %arg0, %arg1 : i32, i32, i32
  }
  func.func @transform_2(%arg0: i32, %arg1: i32) -> (i32, i32, i32) {
    %c0_i32 = arith.constant 0 : i32
    %c0_i32_0 = arith.constant 0 : i32
    return %c0_i32, %arg0, %arg1 : i32, i32, i32
  }
}

</mosaic_0001>

<llo_original>
// kernel: tpu_custom_call.1
$region0: #{tpu_custom_call.1}
  #allocation0 [shape = 'u32[]', space=smem, size = 0x4, offset = 0x4, fixed_abs, tag = 'smem constant byte address 0x4 - core index']
  #allocation1 [shape = 'u32[144,128]{1,0:T(1,128)}', space=vmem, size = 0x12000, scoped, tag = 'internal scratch']
  #allocation8 [shape = 's32[]', space=sflag, size = 0x4, offset = 0, fixed_abs, tag = 'sflag constant byte address 0x0 - dummy sync flag']
  #allocation10 [shape = 's32[]', space=sflag, size = 0x4, offset = 0, fixed_abs, tag = 'sflag constant byte address 0x0 - dummy sync flag']
  %s0 = inlined_call_operand.hbm [shape: f32[256,384], index: 0, kind: input, shape index: {}]
  %s1 = inlined_call_operand.hbm [shape: f32[2,256,384], index: 1, kind: input, shape index: {}]
  %s2 = inlined_call_operand.hbm [shape: f32[2,256,384], index: 2, kind: output, shape index: {}]
  %s3 = sld [smem:[#allocation0]]
  $region49: #{tpu_custom_call.1} parent=0
    _
  %s5 = ssub.s32 1, %s3
  %s6 = scalar_select 0, %s5, %s3
  $region1: #{tpu_custom_call.1} parent=0
    #allocation2 [shape = 'u8[393216]{0}', space=vmem, size = 0x60000, scoped, tag = 'input window, operand 0']
    #allocation3 [shape = 's32[2]{0}', space=sflag, size = 0x8, scoped, tag = 'scoped memory for tpu_custom_call.1']
    #allocation4 [shape = 's32[2]{0}', space=sflag, size = 0x8, scoped, tag = 'scoped memory for tpu_custom_call.1']
    #allocation5 [shape = 'u8[786432]{0}', space=vmem, size = 0xc0000, scoped, tag = 'input window, operand 1']
    #allocation6 [shape = 's32[2]{0}', space=sflag, size = 0x8, scoped, tag = 'scoped memory for tpu_custom_call.1']
    #allocation7 [shape = 'u8[786432]{0}', space=vmem, size = 0xc0000, scoped, tag = 'output window, operand 0']
    %7 = vsyncpa [#allocation3], 0
    %s8 = scalar_lea.sflag [#allocation3], 1
    %9 = vsyncpa %s8, 0
    %10 = vsyncpa [#allocation6], 0
    %s11 = scalar_lea.sflag [#allocation6], 1
    %12 = vsyncpa %s11, 0
    %13 = vsyncpa [#allocation4], 0
    %s14 = scalar_lea.sflag [#allocation4], 1
    %15 = vsyncpa %s14, 0
    loop: start=0, step=1, limit=4
    $region2: #{tpu_custom_call.1} parent=1 // loop_pre_header
      _
    $region3: #{tpu_custom_call.1} parent=1 // loop_header
      %s17 = sphi 0, %s21
      %p18 = scmp.ge.s32.totalorder %s17, 4
      %s24 = sphi 0, %s36
      %s25 = sphi 0, %s32
      %s26 = sphi 0, %s24
      %s27 = sphi 0, %s25
      %s28 = sphi 0, %s26
      %s29 = sphi 0, %s27
      %s41 = sphi 0, %s43
      %s44 = sphi 0, %s41
      %s45 = sphi 0, %s44
      %s61 = sphi 0, %s45
      %s69 = sphi 0, %s71
      %s72 = sphi 0, %s69
      %s73 = sphi 0, %s72
      %s89 = sphi 0, %s73
      %s97 = sphi 0, %s99
      %s100 = sphi 0, %s97
      %s101 = sphi 0, %s100
      %s117 = sphi 0, %s101
    $region4: #{tpu_custom_call.1} parent=1 // loop_header_branch
      %20 = sbr.rel (%p18) target = $region8
    $region5: #{tpu_custom_call.1} parent=1 // loop_body
      %s22 = ssub.s32 %s17, 1
      %s23 = ssub.s32 %s17, 2
      %s30 = sadd.s32 1, %s25
      %p31 = scmp.ge.s32.totalorder %s30, 1
      %s32 = scalar_select %p31, 0, %s30
      %s33 = sadd.s32 1, %s24
      %s34 = scalar_select %p31, %s33, %s24
      %p35 = scmp.ge.s32.totalorder %s34, 2
      %s36 = scalar_select %p35, 0, %s34
      %s37 = ssub.s32 %s24, %s36
      %s38 = ssub.s32 %s25, %s32
      %s39 = sor.u32 %s37, %s38
      %p40 = scmp.eq.s32.totalorder %s39, 0
      %s42 = sadd.s32 %s41, 1
      %s43 = scalar_select %p40, %s41, %s42
      %p46 = pneg %p40
      %p47 = scmp.eq.s32.totalorder %s17, 1
      %p48 = por %p46, %p47
      %p49 = scmp.ne.s32.totalorder %s41, %s44
      %p50 = scmp.eq.s32.totalorder %s17, 0
      %p51 = por %p49, %p50
      %p52 = scmp.ne.s32.totalorder %s41, %s44
      %p53 = scmp.eq.s32.totalorder %s22, 1
      %p54 = por %p52, %p53
      %p55 = scmp.ne.s32.totalorder %s44, %s45
      %p56 = scmp.eq.s32.totalorder %s22, 0
      %p57 = por %p55, %p56
      %p58 = scmp.ne.s32.totalorder %s44, %s45
      %p59 = scmp.eq.s32.totalorder %s23, 1
      %p60 = por %p58, %p59
      %p62 = scmp.ne.s32.totalorder %s45, %s61
      %p63 = scmp.eq.s32.totalorder %s23, 0
      %p64 = por %p62, %p63
      %s65 = ssub.s32 %s24, %s36
      %s66 = ssub.s32 %s25, %s32
      %s67 = sor.u32 %s65, %s66
      %p68 = scmp.eq.s32.totalorder %s67, 0
      %s70 = sadd.s32 %s69, 1
      %s71 = scalar_select %p68, %s69, %s70
      %p74 = pneg %p68
      %p75 = scmp.eq.s32.totalorder %s17, 1
      %p76 = por %p74, %p75
      %p77 = scmp.ne.s32.totalorder %s69, %s72
      %p78 = scmp.eq.s32.totalorder %s17, 0
      %p79 = por %p77, %p78
      %p80 = scmp.ne.s32.totalorder %s69, %s72
      %p81 = scmp.eq.s32.totalorder %s22, 1
      %p82 = por %p80, %p81
      %p83 = scmp.ne.s32.totalorder %s72, %s73
      %p84 = scmp.eq.s32.totalorder %s22, 0
      %p85 = por %p83, %p84
      %p86 = scmp.ne.s32.totalorder %s72, %s73
      %p87 = scmp.eq.s32.totalorder %s23, 1
      %p88 = por %p86, %p87
      %p90 = scmp.ne.s32.totalorder %s73, %s89
      %p91 = scmp.eq.s32.totalorder %s23, 0
      %p92 = por %p90, %p91
      %s93 = ssub.s32 %s24, %s36
      %s94 = ssub.s32 %s25, %s32
      %s95 = sor.u32 %s93, %s94
      %p96 = scmp.eq.s32.totalorder %s95, 0
      %s98 = sadd.s32 %s97, 1
      %s99 = scalar_select %p96, %s97, %s98
      %p102 = pneg %p96
      %p103 = scmp.eq.s32.totalorder %s17, 1
      %p104 = por %p102, %p103
      %p105 = scmp.ne.s32.totalorder %s97, %s100
      %p106 = scmp.eq.s32.totalorder %s17, 0
      %p107 = por %p105, %p106
      %p108 = scmp.ne.s32.totalorder %s97, %s100
      %p109 = scmp.eq.s32.totalorder %s22, 1
      %p110 = por %p108, %p109
      %p111 = scmp.ne.s32.totalorder %s100, %s101
      %p112 = scmp.eq.s32.totalorder %s22, 0
      %p113 = por %p111, %p112
      %p114 = scmp.ne.s32.totalorder %s100, %s101
      %p115 = scmp.eq.s32.totalorder %s23, 1
      %p116 = por %p114, %p115
      %p118 = scmp.ne.s32.totalorder %s101, %s117
      %p119 = scmp.eq.s32.totalorder %s23, 0
      %p120 = por %p118, %p119
      %p121 = scmp.le.s32.totalorder 1, %s17
      %p122 = scmp.lt.s32.totalorder %s17, 3
      %p123 = pnand %p121, %p122
      %p124 = pneg %p123
      // Predicated region
      $region9: #{tpu_custom_call.1} parent=5 // pred_check
        _
      $region10: #{tpu_custom_call.1} parent=5 // pred_check_branch
        %126 = sbr.rel (%p123) target = $region12
      $region11: #{tpu_custom_call.1} parent=5 // pred_region
        %s127 = ssub.s32 %s17, 1
      $region12: #{tpu_custom_call.1} parent=5 // pred_fallthru
        _
      %p128 = scmp.lt.s32.totalorder %s17, 2
      // Predicated region
      $region13: #{tpu_custom_call.1} parent=5 // pred_check
        %p129 = pneg %p128
      $region14: #{tpu_custom_call.1} parent=5 // pred_check_branch
        %131 = sbr.rel (%p129) target = $region16
      $region15: #{tpu_custom_call.1} parent=5 // pred_region
        // Predicated region
        $region17: #{tpu_custom_call.1} parent=15 // pred_check
          %p132 = pneg %p51
        $region18: #{tpu_custom_call.1} parent=15 // pred_check_branch
          %134 = sbr.rel (%p132) target = $region20
        $region19: #{tpu_custom_call.1} parent=15 // pred_region
          %s135 = sand.u32 %s41, 1
          %s136 = scalar_lea.sflag [#allocation3], %s135
          %s137 = sand.u32 %s41, 1
          %s138 = smul.addr %s137, 384
          %s139 = scalar_lea.vmem [#allocation2], %s138
          %s140 = smul.u32 16, %s24
          %s141 = smul.u32 3, %s25
          %s143 = ssub.s32 6144, 6144
          %144 = vsyncadd %s136, %s143
          %s145 = smul.addr %s140, 3
          %s146 = sadd.s32 %s141, %s145
          %s147 = smul.addr %s146, 128
          %s148 = scalar_lea.hbm %s0, %s147
          %s149 = sshll.u32 %s139, 4
          %s150 = int_to_ptr.vmem [resolvable:$true] %s149
          %155 = dma.hbm_to_vmem [thread:$0]  %s148, 6144, %s150, %s136, 384, 384, 24
        $region20: #{tpu_custom_call.1} parent=15 // pred_fallthru
          _
        // Predicated region
        $region21: #{tpu_custom_call.1} parent=15 // pred_check
          %p156 = pneg %p79
        $region22: #{tpu_custom_call.1} parent=15 // pred_check_branch
          %158 = sbr.rel (%p156) target = $region24
        $region23: #{tpu_custom_call.1} parent=15 // pred_region
          #allocation9 [shape = 'u32[6]{0}', space=smem, size = 0x18, scoped, tag = 'DMA stride descriptor']
          %s159 = sand.u32 %s69, 1
          %s160 = scalar_lea.sflag [#allocation6], %s159
          %s161 = sand.u32 %s69, 1
          %s162 = smul.addr %s161, 768
          %s163 = scalar_lea.vmem [#allocation5], %s162
          %s164 = smul.u32 16, %s24
          %s165 = smul.u32 3, %s25
          %s167 = ssub.s32 12288, 12288
          %168 = vsyncadd %s160, %s167
          %s169 = smul.addr %s164, 3
          %s170 = sadd.s32 %s165, %s169
          %s171 = smul.addr %s170, 128
          %s172 = scalar_lea.hbm %s1, %s171
          %s174 = sshll.u32 1, 14
          %s175 = sxor.u32 4294967295, %s174
          %s177 = sld [smem:[#allocation0]]
          %s178 = sadd.s32 2, %s177
          %s180 = sshll.u32 7, 26
          %s181 = sxor.u32 4294967295, %s180
          %s182 = sand.u32 0, %s181
          %s183 = sshll.u32 %s178, 26
          %s184 = sor.u32 %s182, %s183
          %s185 = sshll.u32 %s163, 4
          %s186 = int_to_ptr.vmem [resolvable:$true] %s185
          %192 = sst [smem:[#allocation9]] 12288
          %s193 = scalar_lea.smem [#allocation9], 1
          %194 = sst [smem:[%s193]] 6144
          %s195 = scalar_lea.smem [#allocation9], 2
          %196 = sst [smem:[%s195]] 16
          %s197 = scalar_lea.smem [#allocation9], 3
          %198 = sst [smem:[%s197]] 384
          %s199 = scalar_lea.smem [#allocation9], 4
          %200 = sst [smem:[%s199]] 384
          %s201 = scalar_lea.smem [#allocation9], 5
          %202 = sst [smem:[%s201]] 24
          %204 = dma.general %s172, 12288, %s186, %s160, [#allocation8], [#allocation9], %s184, 0
        $region24: #{tpu_custom_call.1} parent=15 // pred_fallthru
          _
      $region16: #{tpu_custom_call.1} parent=5 // pred_fallthru
        _
      %p205 = scmp.le.s32.totalorder 1, %s17
      %p206 = scmp.lt.s32.totalorder %s17, 3
      %p207 = pnand %p205, %p206
      %p208 = pneg %p207
      // Predicated region
      $region25: #{tpu_custom_call.1} parent=5 // pred_check
        _
      $region26: #{tpu_custom_call.1} parent=5 // pred_check_branch
        %210 = sbr.rel (%p207) target = $region28
      $region27: #{tpu_custom_call.1} parent=5 // pred_region
        %s211 = ssub.s32 %s17, 1
        %s212 = sand.u32 %s44, 1
        %s213 = scalar_lea.sflag [#allocation3], %s212
        %s214 = sand.u32 %s44, 1
        %s215 = smul.addr %s214, 384
        %s216 = scalar_lea.vmem [#allocation2], %s215
        // Predicated region
        $region29: #{tpu_custom_call.1} parent=27 // pred_check
          %p217 = pneg %p57
        $region30: #{tpu_custom_call.1} parent=27 // pred_check_branch
          %219 = sbr.rel (%p217) target = $region32
        $region31: #{tpu_custom_call.1} parent=27 // pred_region
          %220 = dma.done %s213, 6144
        $region32: #{tpu_custom_call.1} parent=27 // pred_fallthru
          _
        %s221 = sand.u32 %s72, 1
        %s222 = scalar_lea.sflag [#allocation6], %s221
        %s223 = sand.u32 %s72, 1
        %s224 = smul.addr %s223, 768
        %s225 = scalar_lea.vmem [#allocation5], %s224
        // Predicated region
        $region33: #{tpu_custom_call.1} parent=27 // pred_check
          %p226 = pneg %p85
        $region34: #{tpu_custom_call.1} parent=27 // pred_check_branch
          %228 = sbr.rel (%p226) target = $region36
        $region35: #{tpu_custom_call.1} parent=27 // pred_region
          %229 = dma.done %s222, 12288
        $region36: #{tpu_custom_call.1} parent=27 // pred_fallthru
          _
        %s230 = sand.u32 %s44, 1
        %s231 = scalar_lea.sflag [#allocation3], %s230
        %s232 = sand.u32 %s44, 1
        %s233 = smul.addr %s232, 384
        %s234 = scalar_lea.vmem [#allocation2], %s233
        %p235 = pneg %p57
        %p236 = pneg %p54
        %s237 = sand.u32 %s72, 1
        %s238 = scalar_lea.sflag [#allocation6], %s237
        %s239 = sand.u32 %s72, 1
        %s240 = smul.addr %s239, 768
        %s241 = scalar_lea.vmem [#allocation5], %s240
        %p242 = pneg %p85
        %p243 = pneg %p82
        %p244 = pneg %p113
        %p245 = pneg %p110
        %s246 = sand.u32 %s100, 1
        %s247 = scalar_lea.sflag [#allocation4], %s246
        %s248 = sand.u32 %s100, 1
        %s249 = smul.addr %s248, 768
        %s250 = scalar_lea.vmem [#allocation7], %s249
        %s251 = smul.u32 16, %s26
        %s252 = smul.u32 3, %s27
        %s253 = smul.u32 16, %s26
        %s254 = smul.u32 3, %s27
        %s255 = smul.u32 16, %s26
        %s256 = smul.u32 3, %s27
        %v257 = vld [vmem:[%s216] sm:$0xff]
        %v258 = vld [vmem:[%s216 + $0x8] sm:$0xff]
        %v259 = vld [vmem:[%s216 + $0x10] sm:$0xff]
        %v260 = vld [vmem:[%s216 + $0x18] sm:$0xff]
        %v261 = vld [vmem:[%s216 + $0x20] sm:$0xff]
        %v262 = vld [vmem:[%s216 + $0x28] sm:$0xff]
        %v263 = vld [vmem:[%s216 + $0x30] sm:$0xff]
        %v264 = vld [vmem:[%s216 + $0x38] sm:$0xff]
        %v265 = vld [vmem:[%s216 + $0x40] sm:$0xff]
        %v266 = vld [vmem:[%s216 + $0x48] sm:$0xff]
        %v267 = vld [vmem:[%s216 + $0x50] sm:$0xff]
        %v268 = vld [vmem:[%s216 + $0x58] sm:$0xff]
        %v269 = vld [vmem:[%s216 + $0x60] sm:$0xff]
        %v270 = vld [vmem:[%s216 + $0x68] sm:$0xff]
        %v271 = vld [vmem:[%s216 + $0x70] sm:$0xff]
        %v272 = vld [vmem:[%s216 + $0x78] sm:$0xff]
        %v273 = vld [vmem:[%s216 + $0x80] sm:$0xff]
        %v274 = vld [vmem:[%s216 + $0x88] sm:$0xff]
        %v275 = vld [vmem:[%s216 + $0x90] sm:$0xff]
        %v276 = vld [vmem:[%s216 + $0x98] sm:$0xff]
        %v277 = vld [vmem:[%s216 + $0xa0] sm:$0xff]
        %v278 = vld [vmem:[%s216 + $0xa8] sm:$0xff]
        %v279 = vld [vmem:[%s216 + $0xb0] sm:$0xff]
        %v280 = vld [vmem:[%s216 + $0xb8] sm:$0xff]
        %v281 = vld [vmem:[%s216 + $0xc0] sm:$0xff]
        %v282 = vld [vmem:[%s216 + $0xc8] sm:$0xff]
        %v283 = vld [vmem:[%s216 + $0xd0] sm:$0xff]
        %v284 = vld [vmem:[%s216 + $0xd8] sm:$0xff]
        %v285 = vld [vmem:[%s216 + $0xe0] sm:$0xff]
        %v286 = vld [vmem:[%s216 + $0xe8] sm:$0xff]
        %v287 = vld [vmem:[%s216 + $0xf0] sm:$0xff]
        %v288 = vld [vmem:[%s216 + $0xf8] sm:$0xff]
        %v289 = vld [vmem:[%s216 + $0x100] sm:$0xff]
        %v290 = vld [vmem:[%s216 + $0x108] sm:$0xff]
        %v291 = vld [vmem:[%s216 + $0x110] sm:$0xff]
        %v292 = vld [vmem:[%s216 + $0x118] sm:$0xff]
        %v293 = vld [vmem:[%s216 + $0x120] sm:$0xff]
        %v294 = vld [vmem:[%s216 + $0x128] sm:$0xff]
        %v295 = vld [vmem:[%s216 + $0x130] sm:$0xff]
        %v296 = vld [vmem:[%s216 + $0x138] sm:$0xff]
        %v297 = vld [vmem:[%s216 + $0x140] sm:$0xff]
        %v298 = vld [vmem:[%s216 + $0x148] sm:$0xff]
        %v299 = vld [vmem:[%s216 + $0x150] sm:$0xff]
        %v300 = vld [vmem:[%s216 + $0x158] sm:$0xff]
        %v301 = vld [vmem:[%s216 + $0x160] sm:$0xff]
        %v302 = vld [vmem:[%s216 + $0x168] sm:$0xff]
        %v303 = vld [vmem:[%s216 + $0x170] sm:$0xff]
        %v304 = vld [vmem:[%s216 + $0x178] sm:$0xff]
        %v305 = vmax.f32 %v257, 0.0
        %v306 = vmax.f32 %v258, 0.0
        %v307 = vmax.f32 %v259, 0.0
        %v308 = vmax.f32 %v260, 0.0
        %v309 = vmax.f32 %v261, 0.0
        %v310 = vmax.f32 %v262, 0.0
        %v311 = vmax.f32 %v263, 0.0
        %v312 = vmax.f32 %v264, 0.0
        %v313 = vmax.f32 %v265, 0.0
        %v314 = vmax.f32 %v266, 0.0
        %v315 = vmax.f32 %v267, 0.0
        %v316 = vmax.f32 %v268, 0.0
        %v317 = vmax.f32 %v269, 0.0
        %v318 = vmax.f32 %v270, 0.0
        %v319 = vmax.f32 %v271, 0.0
        %v320 = vmax.f32 %v272, 0.0
        %v321 = vmax.f32 %v273, 0.0
        %v322 = vmax.f32 %v274, 0.0
        %v323 = vmax.f32 %v275, 0.0
        %v324 = vmax.f32 %v276, 0.0
        %v325 = vmax.f32 %v277, 0.0
        %v326 = vmax.f32 %v278, 0.0
        %v327 = vmax.f32 %v279, 0.0
        %v328 = vmax.f32 %v280, 0.0
        %v329 = vmax.f32 %v281, 0.0
        %v330 = vmax.f32 %v282, 0.0
        %v331 = vmax.f32 %v283, 0.0
        %v332 = vmax.f32 %v284, 0.0
        %v333 = vmax.f32 %v285, 0.0
        %v334 = vmax.f32 %v286, 0.0
        %v335 = vmax.f32 %v287, 0.0
        %v336 = vmax.f32 %v288, 0.0
        %v337 = vmax.f32 %v289, 0.0
        %v338 = vmax.f32 %v290, 0.0
        %v339 = vmax.f32 %v291, 0.0
        %v340 = vmax.f32 %v292, 0.0
        %v341 = vmax.f32 %v293, 0.0
        %v342 = vmax.f32 %v294, 0.0
        %v343 = vmax.f32 %v295, 0.0
        %v344 = vmax.f32 %v296, 0.0
        %v345 = vmax.f32 %v297, 0.0
        %v346 = vmax.f32 %v298, 0.0
        %v347 = vmax.f32 %v299, 0.0
        %v348 = vmax.f32 %v300, 0.0
        %v349 = vmax.f32 %v301, 0.0
        %v350 = vmax.f32 %v302, 0.0
        %v351 = vmax.f32 %v303, 0.0
        %v352 = vmax.f32 %v304, 0.0
        %v353 = vmin.f32 %v305, 1.0
        %v354 = vmin.f32 %v306, 1.0
        %v355 = vmin.f32 %v307, 1.0
        %v356 = vmin.f32 %v308, 1.0
        %v357 = vmin.f32 %v309, 1.0
        %v358 = vmin.f32 %v310, 1.0
        %v359 = vmin.f32 %v311, 1.0
        %v360 = vmin.f32 %v312, 1.0
        %v361 = vmin.f32 %v313, 1.0
        %v362 = vmin.f32 %v314, 1.0
        %v363 = vmin.f32 %v315, 1.0
        %v364 = vmin.f32 %v316, 1.0
        %v365 = vmin.f32 %v317, 1.0
        %v366 = vmin.f32 %v318, 1.0
        %v367 = vmin.f32 %v319, 1.0
        %v368 = vmin.f32 %v320, 1.0
        %v369 = vmin.f32 %v321, 1.0
        %v370 = vmin.f32 %v322, 1.0
        %v371 = vmin.f32 %v323, 1.0
        %v372 = vmin.f32 %v324, 1.0
        %v373 = vmin.f32 %v325, 1.0
        %v374 = vmin.f32 %v326, 1.0
        %v375 = vmin.f32 %v327, 1.0
        %v376 = vmin.f32 %v328, 1.0
        %v377 = vmin.f32 %v329, 1.0
        %v378 = vmin.f32 %v330, 1.0
        %v379 = vmin.f32 %v331, 1.0
        %v380 = vmin.f32 %v332, 1.0
        %v381 = vmin.f32 %v333, 1.0
        %v382 = vmin.f32 %v334, 1.0
        %v383 = vmin.f32 %v335, 1.0
        %v384 = vmin.f32 %v336, 1.0
        %v385 = vmin.f32 %v337, 1.0
        %v386 = vmin.f32 %v338, 1.0
        %v387 = vmin.f32 %v339, 1.0
        %v388 = vmin.f32 %v340, 1.0
        %v389 = vmin.f32 %v341, 1.0
        %v390 = vmin.f32 %v342, 1.0
        %v391 = vmin.f32 %v343, 1.0
        %v392 = vmin.f32 %v344, 1.0
        %v393 = vmin.f32 %v345, 1.0
        %v394 = vmin.f32 %v346, 1.0
        %v395 = vmin.f32 %v347, 1.0
        %v396 = vmin.f32 %v348, 1.0
        %v397 = vmin.f32 %v349, 1.0
        %v398 = vmin.f32 %v350, 1.0
        %v399 = vmin.f32 %v351, 1.0
        %v400 = vmin.f32 %v352, 1.0
        %v401 = vld [vmem:[%s225] sm:$0xff]
        %v402 = vld [vmem:[%s225 + $0x8] sm:$0xff]
        %v403 = vld [vmem:[%s225 + $0x10] sm:$0xff]
        %v404 = vld [vmem:[%s225 + $0x18] sm:$0xff]
        %v405 = vld [vmem:[%s225 + $0x20] sm:$0xff]
        %v406 = vld [vmem:[%s225 + $0x28] sm:$0xff]
        %v407 = vld [vmem:[%s225 + $0x30] sm:$0xff]
        %v408 = vld [vmem:[%s225 + $0x38] sm:$0xff]
        %v409 = vld [vmem:[%s225 + $0x40] sm:$0xff]
        %v410 = vld [vmem:[%s225 + $0x48] sm:$0xff]
        %v411 = vld [vmem:[%s225 + $0x50] sm:$0xff]
        %v412 = vld [vmem:[%s225 + $0x58] sm:$0xff]
        %v413 = vld [vmem:[%s225 + $0x60] sm:$0xff]
        %v414 = vld [vmem:[%s225 + $0x68] sm:$0xff]
        %v415 = vld [vmem:[%s225 + $0x70] sm:$0xff]
        %v416 = vld [vmem:[%s225 + $0x78] sm:$0xff]
        %v417 = vld [vmem:[%s225 + $0x80] sm:$0xff]
        %v418 = vld [vmem:[%s225 + $0x88] sm:$0xff]
        %v419 = vld [vmem:[%s225 + $0x90] sm:$0xff]
        %v420 = vld [vmem:[%s225 + $0x98] sm:$0xff]
        %v421 = vld [vmem:[%s225 + $0xa0] sm:$0xff]
        %v422 = vld [vmem:[%s225 + $0xa8] sm:$0xff]
        %v423 = vld [vmem:[%s225 + $0xb0] sm:$0xff]
        %v424 = vld [vmem:[%s225 + $0xb8] sm:$0xff]
        %v425 = vld [vmem:[%s225 + $0xc0] sm:$0xff]
        %v426 = vld [vmem:[%s225 + $0xc8] sm:$0xff]
        %v427 = vld [vmem:[%s225 + $0xd0] sm:$0xff]
        %v428 = vld [vmem:[%s225 + $0xd8] sm:$0xff]
        %v429 = vld [vmem:[%s225 + $0xe0] sm:$0xff]
        %v430 = vld [vmem:[%s225 + $0xe8] sm:$0xff]
        %v431 = vld [vmem:[%s225 + $0xf0] sm:$0xff]
        %v432 = vld [vmem:[%s225 + $0xf8] sm:$0xff]
        %v433 = vld [vmem:[%s225 + $0x100] sm:$0xff]
        %v434 = vld [vmem:[%s225 + $0x108] sm:$0xff]
        %v435 = vld [vmem:[%s225 + $0x110] sm:$0xff]
        %v436 = vld [vmem:[%s225 + $0x118] sm:$0xff]
        %v437 = vld [vmem:[%s225 + $0x120] sm:$0xff]
        %v438 = vld [vmem:[%s225 + $0x128] sm:$0xff]
        %v439 = vld [vmem:[%s225 + $0x130] sm:$0xff]
        %v440 = vld [vmem:[%s225 + $0x138] sm:$0xff]
        %v441 = vld [vmem:[%s225 + $0x140] sm:$0xff]
        %v442 = vld [vmem:[%s225 + $0x148] sm:$0xff]
        %v443 = vld [vmem:[%s225 + $0x150] sm:$0xff]
        %v444 = vld [vmem:[%s225 + $0x158] sm:$0xff]
        %v445 = vld [vmem:[%s225 + $0x160] sm:$0xff]
        %v446 = vld [vmem:[%s225 + $0x168] sm:$0xff]
        %v447 = vld [vmem:[%s225 + $0x170] sm:$0xff]
        %v448 = vld [vmem:[%s225 + $0x178] sm:$0xff]
        %v449 = vmul.f32 %v401, %v353
        %v450 = vmul.f32 %v402, %v354
        %v451 = vmul.f32 %v403, %v355
        %v452 = vmul.f32 %v404, %v356
        %v453 = vmul.f32 %v405, %v357
        %v454 = vmul.f32 %v406, %v358
        %v455 = vmul.f32 %v407, %v359
        %v456 = vmul.f32 %v408, %v360
        %v457 = vmul.f32 %v409, %v361
        %v458 = vmul.f32 %v410, %v362
        %v459 = vmul.f32 %v411, %v363
        %v460 = vmul.f32 %v412, %v364
        %v461 = vmul.f32 %v413, %v365
        %v462 = vmul.f32 %v414, %v366
        %v463 = vmul.f32 %v415, %v367
        %v464 = vmul.f32 %v416, %v368
        %v465 = vmul.f32 %v417, %v369
        %v466 = vmul.f32 %v418, %v370
        %v467 = vmul.f32 %v419, %v371
        %v468 = vmul.f32 %v420, %v372
        %v469 = vmul.f32 %v421, %v373
        %v470 = vmul.f32 %v422, %v374
        %v471 = vmul.f32 %v423, %v375
        %v472 = vmul.f32 %v424, %v376
        %v473 = vmul.f32 %v425, %v377
        %v474 = vmul.f32 %v426, %v378
        %v475 = vmul.f32 %v427, %v379
        %v476 = vmul.f32 %v428, %v380
        %v477 = vmul.f32 %v429, %v381
        %v478 = vmul.f32 %v430, %v382
        %v479 = vmul.f32 %v431, %v383
        %v480 = vmul.f32 %v432, %v384
        %v481 = vmul.f32 %v433, %v385
        %v482 = vmul.f32 %v434, %v386
        %v483 = vmul.f32 %v435, %v387
        %v484 = vmul.f32 %v436, %v388
        %v485 = vmul.f32 %v437, %v389
        %v486 = vmul.f32 %v438, %v390
        %v487 = vmul.f32 %v439, %v391
        %v488 = vmul.f32 %v440, %v392
        %v489 = vmul.f32 %v441, %v393
        %v490 = vmul.f32 %v442, %v394
        %v491 = vmul.f32 %v443, %v395
        %v492 = vmul.f32 %v444, %v396
        %v493 = vmul.f32 %v445, %v397
        %v494 = vmul.f32 %v446, %v398
        %v495 = vmul.f32 %v447, %v399
        %v496 = vmul.f32 %v448, %v400
        %497 = vst [vmem:[%s250] sm:$0xff] %v449
        %498 = vst [vmem:[%s250 + $0x8] sm:$0xff] %v450
        %499 = vst [vmem:[%s250 + $0x10] sm:$0xff] %v451
        %500 = vst [vmem:[%s250 + $0x18] sm:$0xff] %v452
        %501 = vst [vmem:[%s250 + $0x20] sm:$0xff] %v453
        %502 = vst [vmem:[%s250 + $0x28] sm:$0xff] %v454
        %503 = vst [vmem:[%s250 + $0x30] sm:$0xff] %v455
        %504 = vst [vmem:[%s250 + $0x38] sm:$0xff] %v456
        %505 = vst [vmem:[%s250 + $0x40] sm:$0xff] %v457
        %506 = vst [vmem:[%s250 + $0x48] sm:$0xff] %v458
        %507 = vst [vmem:[%s250 + $0x50] sm:$0xff] %v459
        %508 = vst [vmem:[%s250 + $0x58] sm:$0xff] %v460
        %509 = vst [vmem:[%s250 + $0x60] sm:$0xff] %v461
        %510 = vst [vmem:[%s250 + $0x68] sm:$0xff] %v462
        %511 = vst [vmem:[%s250 + $0x70] sm:$0xff] %v463
        %512 = vst [vmem:[%s250 + $0x78] sm:$0xff] %v464
        %513 = vst [vmem:[%s250 + $0x80] sm:$0xff] %v465
        %514 = vst [vmem:[%s250 + $0x88] sm:$0xff] %v466
        %515 = vst [vmem:[%s250 + $0x90] sm:$0xff] %v467
        %516 = vst [vmem:[%s250 + $0x98] sm:$0xff] %v468
        %517 = vst [vmem:[%s250 + $0xa0] sm:$0xff] %v469
        %518 = vst [vmem:[%s250 + $0xa8] sm:$0xff] %v470
        %519 = vst [vmem:[%s250 + $0xb0] sm:$0xff] %v471
        %520 = vst [vmem:[%s250 + $0xb8] sm:$0xff] %v472
        %521 = vst [vmem:[%s250 + $0xc0] sm:$0xff] %v473
        %522 = vst [vmem:[%s250 + $0xc8] sm:$0xff] %v474
        %523 = vst [vmem:[%s250 + $0xd0] sm:$0xff] %v475
        %524 = vst [vmem:[%s250 + $0xd8] sm:$0xff] %v476
        %525 = vst [vmem:[%s250 + $0xe0] sm:$0xff] %v477
        %526 = vst [vmem:[%s250 + $0xe8] sm:$0xff] %v478
        %527 = vst [vmem:[%s250 + $0xf0] sm:$0xff] %v479
        %528 = vst [vmem:[%s250 + $0xf8] sm:$0xff] %v480
        %529 = vst [vmem:[%s250 + $0x100] sm:$0xff] %v481
        %530 = vst [vmem:[%s250 + $0x108] sm:$0xff] %v482
        %531 = vst [vmem:[%s250 + $0x110] sm:$0xff] %v483
        %532 = vst [vmem:[%s250 + $0x118] sm:$0xff] %v484
        %533 = vst [vmem:[%s250 + $0x120] sm:$0xff] %v485
        %534 = vst [vmem:[%s250 + $0x128] sm:$0xff] %v486
        %535 = vst [vmem:[%s250 + $0x130] sm:$0xff] %v487
        %536 = vst [vmem:[%s250 + $0x138] sm:$0xff] %v488
        %537 = vst [vmem:[%s250 + $0x140] sm:$0xff] %v489
        %538 = vst [vmem:[%s250 + $0x148] sm:$0xff] %v490
        %539 = vst [vmem:[%s250 + $0x150] sm:$0xff] %v491
        %540 = vst [vmem:[%s250 + $0x158] sm:$0xff] %v492
        %541 = vst [vmem:[%s250 + $0x160] sm:$0xff] %v493
        %542 = vst [vmem:[%s250 + $0x168] sm:$0xff] %v494
        %543 = vst [vmem:[%s250 + $0x170] sm:$0xff] %v495
        %544 = vst [vmem:[%s250 + $0x178] sm:$0xff] %v496
        %s545 = scalar_lea.vmem %s225, 384 [#allocation5]
        %v546 = vld [vmem:[%s545] sm:$0xff]
        %v547 = vld [vmem:[%s545 + $0x8] sm:$0xff]
        %v548 = vld [vmem:[%s545 + $0x10] sm:$0xff]
        %v549 = vld [vmem:[%s545 + $0x18] sm:$0xff]
        %v550 = vld [vmem:[%s545 + $0x20] sm:$0xff]
        %v551 = vld [vmem:[%s545 + $0x28] sm:$0xff]
        %v552 = vld [vmem:[%s545 + $0x30] sm:$0xff]
        %v553 = vld [vmem:[%s545 + $0x38] sm:$0xff]
        %v554 = vld [vmem:[%s545 + $0x40] sm:$0xff]
        %v555 = vld [vmem:[%s545 + $0x48] sm:$0xff]
        %v556 = vld [vmem:[%s545 + $0x50] sm:$0xff]
        %v557 = vld [vmem:[%s545 + $0x58] sm:$0xff]
        %v558 = vld [vmem:[%s545 + $0x60] sm:$0xff]
        %v559 = vld [vmem:[%s545 + $0x68] sm:$0xff]
        %v560 = vld [vmem:[%s545 + $0x70] sm:$0xff]
        %v561 = vld [vmem:[%s545 + $0x78] sm:$0xff]
        %v562 = vld [vmem:[%s545 + $0x80] sm:$0xff]
        %v563 = vld [vmem:[%s545 + $0x88] sm:$0xff]
        %v564 = vld [vmem:[%s545 + $0x90] sm:$0xff]
        %v565 = vld [vmem:[%s545 + $0x98] sm:$0xff]
        %v566 = vld [vmem:[%s545 + $0xa0] sm:$0xff]
        %v567 = vld [vmem:[%s545 + $0xa8] sm:$0xff]
        %v568 = vld [vmem:[%s545 + $0xb0] sm:$0xff]
        %v569 = vld [vmem:[%s545 + $0xb8] sm:$0xff]
        %v570 = vld [vmem:[%s545 + $0xc0] sm:$0xff]
        %v571 = vld [vmem:[%s545 + $0xc8] sm:$0xff]
        %v572 = vld [vmem:[%s545 + $0xd0] sm:$0xff]
        %v573 = vld [vmem:[%s545 + $0xd8] sm:$0xff]
        %v574 = vld [vmem:[%s545 + $0xe0] sm:$0xff]
        %v575 = vld [vmem:[%s545 + $0xe8] sm:$0xff]
        %v576 = vld [vmem:[%s545 + $0xf0] sm:$0xff]
        %v577 = vld [vmem:[%s545 + $0xf8] sm:$0xff]
        %v578 = vld [vmem:[%s545 + $0x100] sm:$0xff]
        %v579 = vld [vmem:[%s545 + $0x108] sm:$0xff]
        %v580 = vld [vmem:[%s545 + $0x110] sm:$0xff]
        %v581 = vld [vmem:[%s545 + $0x118] sm:$0xff]
        %v582 = vld [vmem:[%s545 + $0x120] sm:$0xff]
        %v583 = vld [vmem:[%s545 + $0x128] sm:$0xff]
        %v584 = vld [vmem:[%s545 + $0x130] sm:$0xff]
        %v585 = vld [vmem:[%s545 + $0x138] sm:$0xff]
        %v586 = vld [vmem:[%s545 + $0x140] sm:$0xff]
        %v587 = vld [vmem:[%s545 + $0x148] sm:$0xff]
        %v588 = vld [vmem:[%s545 + $0x150] sm:$0xff]
        %v589 = vld [vmem:[%s545 + $0x158] sm:$0xff]
        %v590 = vld [vmem:[%s545 + $0x160] sm:$0xff]
        %v591 = vld [vmem:[%s545 + $0x168] sm:$0xff]
        %v592 = vld [vmem:[%s545 + $0x170] sm:$0xff]
        %v593 = vld [vmem:[%s545 + $0x178] sm:$0xff]
        %v594 = vmul.f32 %v546, %v353
        %v595 = vmul.f32 %v547, %v354
        %v596 = vmul.f32 %v548, %v355
        %v597 = vmul.f32 %v549, %v356
        %v598 = vmul.f32 %v550, %v357
        %v599 = vmul.f32 %v551, %v358
        %v600 = vmul.f32 %v552, %v359
        %v601 = vmul.f32 %v553, %v360
        %v602 = vmul.f32 %v554, %v361
        %v603 = vmul.f32 %v555, %v362
        %v604 = vmul.f32 %v556, %v363
        %v605 = vmul.f32 %v557, %v364
        %v606 = vmul.f32 %v558, %v365
        %v607 = vmul.f32 %v559, %v366
        %v608 = vmul.f32 %v560, %v367
        %v609 = vmul.f32 %v561, %v368
        %v610 = vmul.f32 %v562, %v369
        %v611 = vmul.f32 %v563, %v370
        %v612 = vmul.f32 %v564, %v371
        %v613 = vmul.f32 %v565, %v372
        %v614 = vmul.f32 %v566, %v373
        %v615 = vmul.f32 %v567, %v374
        %v616 = vmul.f32 %v568, %v375
        %v617 = vmul.f32 %v569, %v376
        %v618 = vmul.f32 %v570, %v377
        %v619 = vmul.f32 %v571, %v378
        %v620 = vmul.f32 %v572, %v379
        %v621 = vmul.f32 %v573, %v380
        %v622 = vmul.f32 %v574, %v381
        %v623 = vmul.f32 %v575, %v382
        %v624 = vmul.f32 %v576, %v383
        %v625 = vmul.f32 %v577, %v384
        %v626 = vmul.f32 %v578, %v385
        %v627 = vmul.f32 %v579, %v386
        %v628 = vmul.f32 %v580, %v387
        %v629 = vmul.f32 %v581, %v388
        %v630 = vmul.f32 %v582, %v389
        %v631 = vmul.f32 %v583, %v390
        %v632 = vmul.f32 %v584, %v391
        %v633 = vmul.f32 %v585, %v392
        %v634 = vmul.f32 %v586, %v393
        %v635 = vmul.f32 %v587, %v394
        %v636 = vmul.f32 %v588, %v395
        %v637 = vmul.f32 %v589, %v396
        %v638 = vmul.f32 %v590, %v397
        %v639 = vmul.f32 %v591, %v398
        %v640 = vmul.f32 %v592, %v399
        %v641 = vmul.f32 %v593, %v400
        %s642 = scalar_lea.vmem %s250, 384 [#allocation7]
        %643 = vst [vmem:[%s642] sm:$0xff] %v594
        %644 = vst [vmem:[%s642 + $0x8] sm:$0xff] %v595
        %645 = vst [vmem:[%s642 + $0x10] sm:$0xff] %v596
        %646 = vst [vmem:[%s642 + $0x18] sm:$0xff] %v597
        %647 = vst [vmem:[%s642 + $0x20] sm:$0xff] %v598
        %648 = vst [vmem:[%s642 + $0x28] sm:$0xff] %v599
        %649 = vst [vmem:[%s642 + $0x30] sm:$0xff] %v600
        %650 = vst [vmem:[%s642 + $0x38] sm:$0xff] %v601
        %651 = vst [vmem:[%s642 + $0x40] sm:$0xff] %v602
        %652 = vst [vmem:[%s642 + $0x48] sm:$0xff] %v603
        %653 = vst [vmem:[%s642 + $0x50] sm:$0xff] %v604
        %654 = vst [vmem:[%s642 + $0x58] sm:$0xff] %v605
        %655 = vst [vmem:[%s642 + $0x60] sm:$0xff] %v606
        %656 = vst [vmem:[%s642 + $0x68] sm:$0xff] %v607
        %657 = vst [vmem:[%s642 + $0x70] sm:$0xff] %v608
        %658 = vst [vmem:[%s642 + $0x78] sm:$0xff] %v609
        %659 = vst [vmem:[%s642 + $0x80] sm:$0xff] %v610
        %660 = vst [vmem:[%s642 + $0x88] sm:$0xff] %v611
        %661 = vst [vmem:[%s642 + $0x90] sm:$0xff] %v612
        %662 = vst [vmem:[%s642 + $0x98] sm:$0xff] %v613
        %663 = vst [vmem:[%s642 + $0xa0] sm:$0xff] %v614
        %664 = vst [vmem:[%s642 + $0xa8] sm:$0xff] %v615
        %665 = vst [vmem:[%s642 + $0xb0] sm:$0xff] %v616
        %666 = vst [vmem:[%s642 + $0xb8] sm:$0xff] %v617
        %667 = vst [vmem:[%s642 + $0xc0] sm:$0xff] %v618
        %668 = vst [vmem:[%s642 + $0xc8] sm:$0xff] %v619
        %669 = vst [vmem:[%s642 + $0xd0] sm:$0xff] %v620
        %670 = vst [vmem:[%s642 + $0xd8] sm:$0xff] %v621
        %671 = vst [vmem:[%s642 + $0xe0] sm:$0xff] %v622
        %672 = vst [vmem:[%s642 + $0xe8] sm:$0xff] %v623
        %673 = vst [vmem:[%s642 + $0xf0] sm:$0xff] %v624
        %674 = vst [vmem:[%s642 + $0xf8] sm:$0xff] %v625
        %675 = vst [vmem:[%s642 + $0x100] sm:$0xff] %v626
        %676 = vst [vmem:[%s642 + $0x108] sm:$0xff] %v627
        %677 = vst [vmem:[%s642 + $0x110] sm:$0xff] %v628
        %678 = vst [vmem:[%s642 + $0x118] sm:$0xff] %v629
        %679 = vst [vmem:[%s642 + $0x120] sm:$0xff] %v630
        %680 = vst [vmem:[%s642 + $0x128] sm:$0xff] %v631
        %681 = vst [vmem:[%s642 + $0x130] sm:$0xff] %v632
        %682 = vst [vmem:[%s642 + $0x138] sm:$0xff] %v633
        %683 = vst [vmem:[%s642 + $0x140] sm:$0xff] %v634
        %684 = vst [vmem:[%s642 + $0x148] sm:$0xff] %v635
        %685 = vst [vmem:[%s642 + $0x150] sm:$0xff] %v636
        %686 = vst [vmem:[%s642 + $0x158] sm:$0xff] %v637
        %687 = vst [vmem:[%s642 + $0x160] sm:$0xff] %v638
        %688 = vst [vmem:[%s642 + $0x168] sm:$0xff] %v639
        %689 = vst [vmem:[%s642 + $0x170] sm:$0xff] %v640
        %690 = vst [vmem:[%s642 + $0x178] sm:$0xff] %v641
        %s691 = sand.u32 %s100, 1
        %s692 = scalar_lea.sflag [#allocation4], %s691
        %s693 = sand.u32 %s100, 1
        %s694 = smul.addr %s693, 768
        %s695 = scalar_lea.vmem [#allocation7], %s694
        // Predicated region
        $region37: #{tpu_custom_call.1} parent=27 // pred_check
          %p696 = pneg %p110
        $region38: #{tpu_custom_call.1} parent=27 // pred_check_branch
          %698 = sbr.rel (%p696) target = $region40
        $region39: #{tpu_custom_call.1} parent=27 // pred_region
          #allocation11 [shape = 'u32[6]{0}', space=smem, size = 0x18, scoped, tag = 'DMA stride descriptor']
          %s699 = smul.u32 16, %s26
          %s700 = smul.u32 3, %s27
          %s702 = ssub.s32 12288, 12288
          %703 = vsyncadd %s692, %s702
          %s704 = smul.addr %s699, 3
          %s705 = sadd.s32 %s700, %s704
          %s706 = smul.addr %s705, 128
          %s707 = scalar_lea.hbm %s2, %s706
          %s709 = sshll.u32 1, 14
          %s710 = sxor.u32 4294967295, %s709
          %s713 = sshll.u32 7, 18
          %s714 = sxor.u32 4294967295, %s713
          %s715 = sand.u32 0, %s714
          %s717 = sor.u32 %s715, 0
          %s719 = sshll.u32 3, 24
          %s720 = sxor.u32 4294967295, %s719
          %s721 = sand.u32 %s717, %s720
          %s723 = sor.u32 %s721, 0
          %s724 = sshll.u32 %s695, 4
          %s725 = int_to_ptr.vmem [resolvable:$true] %s724
          %731 = sst [smem:[#allocation11]] 6144
          %s732 = scalar_lea.smem [#allocation11], 1
          %733 = sst [smem:[%s732]] 12288
          %s734 = scalar_lea.smem [#allocation11], 2
          %735 = sst [smem:[%s734]] 16
          %s736 = scalar_lea.smem [#allocation11], 3
          %737 = sst [smem:[%s736]] 384
          %s738 = scalar_lea.smem [#allocation11], 4
          %739 = sst [smem:[%s738]] 384
          %s740 = scalar_lea.smem [#allocation11], 5
          %741 = sst [smem:[%s740]] 24
          %743 = dma.general %s725, 12288, %s707, %s692, [#allocation10], [#allocation11], %s723, 0
        $region40: #{tpu_custom_call.1} parent=27 // pred_fallthru
          _
      $region28: #{tpu_custom_call.1} parent=5 // pred_fallthru
        _
      %p744 = scmp.le.s32.totalorder 2, %s17
      // Predicated region
      $region41: #{tpu_custom_call.1} parent=5 // pred_check
        %p745 = pneg %p744
      $region42: #{tpu_custom_call.1} parent=5 // pred_check_branch
        %747 = sbr.rel (%p745) target = $region44
      $region43: #{tpu_custom_call.1} parent=5 // pred_region
        %s748 = ssub.s32 %s17, 2
        // Predicated region
        $region45: #{tpu_custom_call.1} parent=43 // pred_check
          %p749 = pneg %p116
        $region46: #{tpu_custom_call.1} parent=43 // pred_check_branch
          %751 = sbr.rel (%p749) target = $region48
        $region47: #{tpu_custom_call.1} parent=43 // pred_region
          %s752 = sand.u32 %s101, 1
          %s753 = scalar_lea.sflag [#allocation4], %s752
          %s754 = sand.u32 %s101, 1
          %s755 = smul.addr %s754, 768
          %s756 = scalar_lea.vmem [#allocation7], %s755
          %757 = dma.done %s753, 12288
        $region48: #{tpu_custom_call.1} parent=43 // pred_fallthru
          _
      $region44: #{tpu_custom_call.1} parent=5 // pred_fallthru
        _
    $region6: #{tpu_custom_call.1} parent=1 // loop_footer
      %s21 = sadd.s32 1, %s17
    $region7: #{tpu_custom_call.1} parent=1 // loop_footer_branch
      %16 = sbr.rel target = $region3
    $region8: #{tpu_custom_call.1} parent=1 // loop_exit
      _
    %758 = vsyncpa [#allocation3], 1
    %s759 = scalar_lea.sflag [#allocation3], 1
    %760 = vsyncpa %s759, 1
    %761 = vsyncpa [#allocation6], 1
    %s762 = scalar_lea.sflag [#allocation6], 1
    %763 = vsyncpa %s762, 1
    %764 = vsyncpa [#allocation4], 1
    %s765 = scalar_lea.sflag [#allocation4], 1
    %766 = vsyncpa %s765, 1

</llo_original>
